<compile_context>
chip_gen: v5e
topology: v5e:2x2
jax: 0.10.0
libtpu: 0.0.40
codegen_flags: <defaults>
</compile_context>

<pallas_src>
import jax
import jax.numpy as jnp
from jax.experimental import pallas as pl
from jax.experimental.pallas import tpu as pltpu


def _round_up(x, m):
    return ((x + m - 1) // m) * m


def _trigger_kernel_1d(state_ref, values_ref, cmask_ref, out_ref):
    # state_ref:  (TB, W)       int32  flat FSM state tile
    # values_ref: (num_ops, W)  int32  per-operator match targets
    # cmask_ref:  (num_ops, W)  int32  1 where the operator constrains the slot
    # out_ref:    (TB, num_ops) int32  1 where operator o matched batch row b
    state = state_ref[...]
    values = values_ref[...]
    cmask = cmask_ref[...]
    num_ops = values.shape[0]
    for o in range(num_ops):            # num_ops is tiny: unroll
        v_row = values[o:o + 1, :]      # (1, W)
        m_row = cmask[o:o + 1, :]       # (1, W)
        # 2 VALU ops / element: neq + select; signed-safe int32 lane sum.
        mism = jnp.where(state != v_row, m_row, 0)        # (TB, W)
        cnt = jnp.sum(mism, axis=-1, keepdims=True)       # (TB, 1)
        out_ref[:, o:o + 1] = (cnt == 0).astype(out_ref.dtype)


def _trigger_kernel_2d(state_ref, values_ref, cmask_ref, out_ref, acc_ref):
    # Wide-W path: W is tiled; acc_ref holds running mismatch counts per op.
    k = pl.program_id(1)

    @pl.when(k == 0)
    def _():
        acc_ref[...] = jnp.zeros_like(acc_ref)

    state = state_ref[...]
    values = values_ref[...]
    cmask = cmask_ref[...]
    num_ops = values.shape[0]
    for o in range(num_ops):
        v_row = values[o:o + 1, :]
        m_row = cmask[o:o + 1, :]
        mism = jnp.where(state != v_row, m_row, 0)
        acc_ref[:, o:o + 1] += jnp.sum(mism, axis=-1, keepdims=True)

    @pl.when(k == pl.num_programs(1) - 1)
    def _():
        out_ref[...] = (acc_ref[...] == 0).astype(out_ref.dtype)


def int_state_trigger(state, match_values, channel_masks, *,
                      tile_b=1024, tile_w=1024):
    """IntStateTrigger.forward.

    state:         (B, W) int   -- flat FSM state (CBTensor content, ordered)
    match_values:  (num_ops, W) int  -- registered target values per operator
    channel_masks: (num_ops, W) bool -- True at wildcard positions
    returns:       (B, num_ops) bool -- True where operator o matched row b
    """
    B, W = state.shape
    num_ops = match_values.shape[0]
    if num_ops == 0:
        return jnp.zeros((B, 0), dtype=jnp.bool_)

    # TODO(synk): upstream CBTensor state is torch.long; values outside int32
    #             range would truncate here (FSM slot values are small ints).
    state_i = state.astype(jnp.int32)            # no-op when already int32
    values_i = match_values.astype(jnp.int32)    # tiny tables
    cmask_i = jnp.logical_not(channel_masks).astype(jnp.int32)  # 1=constrained

    assert tile_w % 128 == 0
    tile_b = min(tile_b, _round_up(B, 8))
    grid_b = pl.cdiv(B, tile_b)

    if W <= tile_w:
        # Common FSM case: the whole flat state width is one lane block.
        out = pl.pallas_call(
            _trigger_kernel_1d,
            out_shape=jax.ShapeDtypeStruct((B, num_ops), jnp.int32),
            grid_spec=pltpu.PrefetchScalarGridSpec(
                num_scalar_prefetch=0,
                grid=(grid_b,),
                in_specs=[
                    pl.BlockSpec((tile_b, W), lambda i: (i, 0)),       # state
                    pl.BlockSpec((num_ops, W), lambda i: (0, 0)),      # targets
                    pl.BlockSpec((num_ops, W), lambda i: (0, 0)),      # constraints
                ],
                out_specs=pl.BlockSpec((tile_b, num_ops), lambda i: (i, 0)),
            ),
            compiler_params=pltpu.CompilerParams(
                dimension_semantics=("parallel",)),
        )(state_i, values_i, cmask_i)
    else:
        # Wide-W path: tile W (reduction axis last).  Only the tiny tables are
        # padded; padded lanes are unconstrained (cmask 0) so garbage in the
        # state's partial last W block can never flip a match.
        grid_k = pl.cdiv(W, tile_w)
        Wp = grid_k * tile_w
        if Wp != W:
            values_i = jnp.pad(values_i, ((0, 0), (0, Wp - W)))
            cmask_i = jnp.pad(cmask_i, ((0, 0), (0, Wp - W)))
        out = pl.pallas_call(
            _trigger_kernel_2d,
            out_shape=jax.ShapeDtypeStruct((B, num_ops), jnp.int32),
            grid_spec=pltpu.PrefetchScalarGridSpec(
                num_scalar_prefetch=0,
                grid=(grid_b, grid_k),
                in_specs=[
                    pl.BlockSpec((tile_b, tile_w), lambda i, k: (i, k)),
                    pl.BlockSpec((num_ops, tile_w), lambda i, k: (0, k)),
                    pl.BlockSpec((num_ops, tile_w), lambda i, k: (0, k)),
                ],
                out_specs=pl.BlockSpec((tile_b, num_ops), lambda i, k: (i, 0)),
                scratch_shapes=[pltpu.VMEM((tile_b, num_ops), jnp.int32)],
            ),
            compiler_params=pltpu.CompilerParams(
                dimension_semantics=("parallel", "arbitrary")),
        )(state_i, values_i, cmask_i)

    return out.astype(jnp.bool_)


if __name__ == "__main__":
    key = jax.random.PRNGKey(0)
    k1, k2 = jax.random.split(key)

    # --- Case 1: common FSM shape (small W -> 1-D batch-grid path) ---
    B, W, num_ops = 8, 32, 4
    channel_masks = jnp.ones((num_ops, W), dtype=jnp.bool_)
    match_values = jnp.zeros((num_ops, W), dtype=jnp.int32)
    # op 0: no int triggers -> all wildcard (always matches)
    # op 1: positions 0..3 must equal 1,2,3,4
    channel_masks = channel_masks.at[1, 0:4].set(False)
    match_values = match_values.at[1, 0:4].set(jnp.array([1, 2, 3, 4], jnp.int32))
    # op 2: positions 4,5 must equal 7,9
    channel_masks = channel_masks.at[2, 4].set(False).at[2, 5].set(False)
    match_values = match_values.at[2, 4].set(7).at[2, 5].set(9)
    # op 3: position 10 must equal 0
    channel_masks = channel_masks.at[3, 10].set(False)
    match_values = match_values.at[3, 10].set(0)

    state = jax.random.randint(k1, (B, W), 0, 16, dtype=jnp.int32)
    state = state.at[0, 0:4].set(jnp.array([1, 2, 3, 4], jnp.int32))
    state = state.at[1, 4].set(7).at[1, 5].set(9)
    state = state.at[2, 10].set(0)

    out = jax.block_until_ready(
        jax.jit(int_state_trigger)(state, match_values, channel_masks))
    ref = jnp.all((state[:, None, :] == match_values[None, :, :])
                  | channel_masks[None, :, :], axis=-1)
    assert out.shape == (B, num_ops) and out.dtype == jnp.bool_
    assert bool(jnp.all(out == ref))

    # --- Case 2: wide flat state (exercises the tiled 2-D reduction path) ---
    B2, W2, num_ops2 = 16, 1300, 3
    cm2 = jnp.ones((num_ops2, W2), dtype=jnp.bool_)
    mv2 = jnp.zeros((num_ops2, W2), dtype=jnp.int32)
    cm2 = cm2.at[1, 0].set(False).at[1, 700].set(False).at[1, 1299].set(False)
    mv2 = mv2.at[1, 0].set(3).at[1, 700].set(5).at[1, 1299].set(2)
    cm2 = cm2.at[2, 5].set(False)
    mv2 = mv2.at[2, 5].set(1)

    state2 = jax.random.randint(k2, (B2, W2), 0, 8, dtype=jnp.int32)
    state2 = state2.at[0, 0].set(3).at[0, 700].set(5).at[0, 1299].set(2)
    state2 = state2.at[1, 5].set(1)

    out2 = jax.block_until_ready(
        jax.jit(int_state_trigger)(state2, mv2, cm2))
    ref2 = jnp.all((state2[:, None, :] == mv2[None, :, :]) | cm2[None, :, :],
                   axis=-1)
    assert out2.shape == (B2, num_ops2) and out2.dtype == jnp.bool_
    assert bool(jnp.all(out2 == ref2))

    print("KERNEL_OK")
</pallas_src>

<mosaic_0001>
module attributes {stable_mosaic.version = 11 : i64} {
  func.func @_trigger_kernel_1d(%arg0: i32, %arg1: memref<8x32xi32, #tpu.memory_space<vmem>>, %arg2: memref<4x32xi32, #tpu.memory_space<vmem>>, %arg3: memref<4x32xi32, #tpu.memory_space<vmem>>, %arg4: memref<8x4xi32, #tpu.memory_space<vmem>>) attributes {dimension_semantics = [#tpu.dimension_semantics<parallel>], iteration_bounds = array<i64: 1>, scalar_prefetch = 0 : i64, scratch_operands = 0 : i64, tpu.core_type = #tpu.core_type<tc>, window_params = [{transform_indices = @transform_0, window_bounds = array<i64: 8, 32>}, {pipeline_mode = #tpu.pipeline_mode<synchronous>, transform_indices = @transform_1, window_bounds = array<i64: 4, 32>}, {pipeline_mode = #tpu.pipeline_mode<synchronous>, transform_indices = @transform_2, window_bounds = array<i64: 4, 32>}, {transform_indices = @transform_3, window_bounds = array<i64: 8, 4>}]} {
    %c0 = arith.constant 0 : index
    %c0_0 = arith.constant 0 : index
    %0 = vector.load %arg1[%c0, %c0_0] : memref<8x32xi32, #tpu.memory_space<vmem>>, vector<8x32xi32>
    %c0_1 = arith.constant 0 : index
    %c0_2 = arith.constant 0 : index
    %1 = vector.load %arg2[%c0_1, %c0_2] : memref<4x32xi32, #tpu.memory_space<vmem>>, vector<4x32xi32>
    %c0_3 = arith.constant 0 : index
    %c0_4 = arith.constant 0 : index
    %2 = vector.load %arg3[%c0_3, %c0_4] : memref<4x32xi32, #tpu.memory_space<vmem>>, vector<4x32xi32>
    %3 = vector.extract_strided_slice %1 {offsets = [0, 0], sizes = [1, 32], strides = [1, 1]} : vector<4x32xi32> to vector<1x32xi32>
    %4 = vector.extract_strided_slice %2 {offsets = [0, 0], sizes = [1, 32], strides = [1, 1]} : vector<4x32xi32> to vector<1x32xi32>
    %5 = vector.broadcast %3 : vector<1x32xi32> to vector<8x32xi32>
    %6 = arith.cmpi ne, %0, %5 : vector<8x32xi32>
    %c0_i32 = arith.constant 0 : i32
    %7 = vector.shape_cast %4 : vector<1x32xi32> to vector<1x32xi32>
    %8 = vector.broadcast %7 : vector<1x32xi32> to vector<8x32xi32>
    %9 = vector.broadcast %c0_i32 : i32 to vector<8x32xi32>
    %10 = arith.select %6, %8, %9 : vector<8x32xi1>, vector<8x32xi32>
    %cst = arith.constant dense<0> : vector<8xi32>
    %11 = vector.multi_reduction <add>, %10, %cst [1] : vector<8x32xi32> to vector<8xi32>
    %12 = vector.shape_cast %11 : vector<8xi32> to vector<8x1xi32>
    %c0_i32_5 = arith.constant 0 : i32
    %13 = vector.broadcast %c0_i32_5 : i32 to vector<8x1xi32>
    %14 = arith.cmpi eq, %12, %13 : vector<8x1xi32>
    %15 = arith.extui %14 : vector<8x1xi1> to vector<8x1xi32>
    %c0_6 = arith.constant 0 : index
    %c0_7 = arith.constant 0 : index
    %16 = vector.load %arg4[%c0_6, %c0_7] : memref<8x4xi32, #tpu.memory_space<vmem>>, vector<8x1xi32>
    tpu.vector_store %arg4[%c0_6, %c0_7], %15 {strides = array<i32>} : memref<8x4xi32, #tpu.memory_space<vmem>>, vector<8x1xi32>,
    %17 = vector.extract_strided_slice %1 {offsets = [1, 0], sizes = [1, 32], strides = [1, 1]} : vector<4x32xi32> to vector<1x32xi32>
    %18 = vector.extract_strided_slice %2 {offsets = [1, 0], sizes = [1, 32], strides = [1, 1]} : vector<4x32xi32> to vector<1x32xi32>
    %19 = vector.broadcast %17 : vector<1x32xi32> to vector<8x32xi32>
    %20 = arith.cmpi ne, %0, %19 : vector<8x32xi32>
    %c0_i32_8 = arith.constant 0 : i32
    %21 = vector.shape_cast %18 : vector<1x32xi32> to vector<1x32xi32>
    %22 = vector.broadcast %21 : vector<1x32xi32> to vector<8x32xi32>
    %23 = vector.broadcast %c0_i32_8 : i32 to vector<8x32xi32>
    %24 = arith.select %20, %22, %23 : vector<8x32xi1>, vector<8x32xi32>
    %cst_9 = arith.constant dense<0> : vector<8xi32>
    %25 = vector.multi_reduction <add>, %24, %cst_9 [1] : vector<8x32xi32> to vector<8xi32>
    %26 = vector.shape_cast %25 : vector<8xi32> to vector<8x1xi32>
    %c0_i32_10 = arith.constant 0 : i32
    %27 = vector.broadcast %c0_i32_10 : i32 to vector<8x1xi32>
    %28 = arith.cmpi eq, %26, %27 : vector<8x1xi32>
    %29 = arith.extui %28 : vector<8x1xi1> to vector<8x1xi32>
    %c0_11 = arith.constant 0 : index
    %c1 = arith.constant 1 : index
    %30 = vector.load %arg4[%c0_11, %c1] : memref<8x4xi32, #tpu.memory_space<vmem>>, vector<8x1xi32>
    tpu.vector_store %arg4[%c0_11, %c1], %29 {strides = array<i32>} : memref<8x4xi32, #tpu.memory_space<vmem>>, vector<8x1xi32>,
    %31 = vector.extract_strided_slice %1 {offsets = [2, 0], sizes = [1, 32], strides = [1, 1]} : vector<4x32xi32> to vector<1x32xi32>
    %32 = vector.extract_strided_slice %2 {offsets = [2, 0], sizes = [1, 32], strides = [1, 1]} : vector<4x32xi32> to vector<1x32xi32>
    %33 = vector.broadcast %31 : vector<1x32xi32> to vector<8x32xi32>
    %34 = arith.cmpi ne, %0, %33 : vector<8x32xi32>
    %c0_i32_12 = arith.constant 0 : i32
    %35 = vector.shape_cast %32 : vector<1x32xi32> to vector<1x32xi32>
    %36 = vector.broadcast %35 : vector<1x32xi32> to vector<8x32xi32>
    %37 = vector.broadcast %c0_i32_12 : i32 to vector<8x32xi32>
    %38 = arith.select %34, %36, %37 : vector<8x32xi1>, vector<8x32xi32>
    %cst_13 = arith.constant dense<0> : vector<8xi32>
    %39 = vector.multi_reduction <add>, %38, %cst_13 [1] : vector<8x32xi32> to vector<8xi32>
    %40 = vector.shape_cast %39 : vector<8xi32> to vector<8x1xi32>
    %c0_i32_14 = arith.constant 0 : i32
    %41 = vector.broadcast %c0_i32_14 : i32 to vector<8x1xi32>
    %42 = arith.cmpi eq, %40, %41 : vector<8x1xi32>
    %43 = arith.extui %42 : vector<8x1xi1> to vector<8x1xi32>
    %c0_15 = arith.constant 0 : index
    %c2 = arith.constant 2 : index
    %44 = vector.load %arg4[%c0_15, %c2] : memref<8x4xi32, #tpu.memory_space<vmem>>, vector<8x1xi32>
    tpu.vector_store %arg4[%c0_15, %c2], %43 {strides = array<i32>} : memref<8x4xi32, #tpu.memory_space<vmem>>, vector<8x1xi32>,
    %45 = vector.extract_strided_slice %1 {offsets = [3, 0], sizes = [1, 32], strides = [1, 1]} : vector<4x32xi32> to vector<1x32xi32>
    %46 = vector.extract_strided_slice %2 {offsets = [3, 0], sizes = [1, 32], strides = [1, 1]} : vector<4x32xi32> to vector<1x32xi32>
    %47 = vector.broadcast %45 : vector<1x32xi32> to vector<8x32xi32>
    %48 = arith.cmpi ne, %0, %47 : vector<8x32xi32>
    %c0_i32_16 = arith.constant 0 : i32
    %49 = vector.shape_cast %46 : vector<1x32xi32> to vector<1x32xi32>
    %50 = vector.broadcast %49 : vector<1x32xi32> to vector<8x32xi32>
    %51 = vector.broadcast %c0_i32_16 : i32 to vector<8x32xi32>
    %52 = arith.select %48, %50, %51 : vector<8x32xi1>, vector<8x32xi32>
    %cst_17 = arith.constant dense<0> : vector<8xi32>
    %53 = vector.multi_reduction <add>, %52, %cst_17 [1] : vector<8x32xi32> to vector<8xi32>
    %54 = vector.shape_cast %53 : vector<8xi32> to vector<8x1xi32>
    %c0_i32_18 = arith.constant 0 : i32
    %55 = vector.broadcast %c0_i32_18 : i32 to vector<8x1xi32>
    %56 = arith.cmpi eq, %54, %55 : vector<8x1xi32>
    %57 = arith.extui %56 : vector<8x1xi1> to vector<8x1xi32>
    %c0_19 = arith.constant 0 : index
    %c3 = arith.constant 3 : index
    %58 = vector.load %arg4[%c0_19, %c3] : memref<8x4xi32, #tpu.memory_space<vmem>>, vector<8x1xi32>
    tpu.vector_store %arg4[%c0_19, %c3], %57 {strides = array<i32>} : memref<8x4xi32, #tpu.memory_space<vmem>>, vector<8x1xi32>,
    return
  }
  func.func @transform_0(%arg0: i32) -> (i32, i32) {
    %c0_i32 = arith.constant 0 : i32
    %c0_i32_0 = arith.constant 0 : i32
    return %arg0, %c0_i32 : i32, i32
  }
  func.func @transform_1(%arg0: i32) -> (i32, i32) {
    %c0_i32 = arith.constant 0 : i32
    %c0_i32_0 = arith.constant 0 : i32
    %c0_i32_1 = arith.constant 0 : i32
    return %c0_i32, %c0_i32_0 : i32, i32
  }
  func.func @transform_2(%arg0: i32) -> (i32, i32) {
    %c0_i32 = arith.constant 0 : i32
    %c0_i32_0 = arith.constant 0 : i32
    %c0_i32_1 = arith.constant 0 : i32
    return %c0_i32, %c0_i32_0 : i32, i32
  }
  func.func @transform_3(%arg0: i32) -> (i32, i32) {
    %c0_i32 = arith.constant 0 : i32
    %c0_i32_0 = arith.constant 0 : i32
    return %arg0, %c0_i32 : i32, i32
  }
}

</mosaic_0001>

<llo_original>
// kernel: int_state_trigger.1
$region0: #{int_state_trigger.1}
  #allocation0 [shape = 'u32[]', space=smem, size = 0x4, offset = 0x4, fixed_abs, tag = 'smem constant byte address 0x4 - core index']
  #allocation1 [shape = 'u32[72,128]{1,0:T(1,128)}', space=vmem, size = 0x9000, scoped, tag = 'internal scratch']
  %s0 = inlined_call_operand.hbm [shape: s32[8,32], index: 0, kind: input, shape index: {}]
  %s1 = inlined_call_operand.vmem [shape: s32[4,32], index: 1, kind: input, shape index: {}]
  %s2 = inlined_call_operand.vmem [shape: s32[4,32], index: 2, kind: input, shape index: {}]
  %s3 = inlined_call_operand.vmem [shape: s32[8,4], index: 3, kind: output, shape index: {}]
  %s4 = sld [smem:[#allocation0]]
  $region26: #{int_state_trigger.1} parent=0
    _
  %s6 = ssub.s32 1, %s4
  %s7 = scalar_select 0, %s6, %s4
  $region1: #{int_state_trigger.1} parent=0
    #allocation2 [shape = 'u8[4096]{0}', space=vmem, size = 0x1000, scoped, tag = 'input window, operand 0, single buffered']
    #allocation3 [shape = 's32[1]{0}', space=sflag, size = 0x4, scoped, tag = 'scoped memory for int_state_trigger.1']
    %8 = vsyncpa [#allocation3], 0
    // Predicated region
    $region2: #{int_state_trigger.1} parent=1 // pred_check
      _
    $region3: #{int_state_trigger.1} parent=1 // pred_check_branch
      %10 = sbr.rel (0) target = $region5
    $region4: #{int_state_trigger.1} parent=1 // pred_region
      %12 = vsyncadd [#allocation3], 0
      %s14 = sshll.u32 %s0, 4
      %s15 = int_to_ptr.hbm [resolvable:$true] %s14
      %s16 = sshll.u32 [#allocation2], 4
      %s17 = int_to_ptr.vmem [resolvable:$true] %s16
      %19 = dma.hbm_to_vmem [thread:$0]  %s15, 128, %s17, [#allocation3]
    $region5: #{int_state_trigger.1} parent=1 // pred_fallthru
      _
    // Predicated region
    $region6: #{int_state_trigger.1} parent=1 // pred_check
      _
    $region7: #{int_state_trigger.1} parent=1 // pred_check_branch
      %21 = sbr.rel (0) target = $region9
    $region8: #{int_state_trigger.1} parent=1 // pred_region
      _
    $region9: #{int_state_trigger.1} parent=1 // pred_fallthru
      _
    // Predicated region
    $region10: #{int_state_trigger.1} parent=1 // pred_check
      _
    $region11: #{int_state_trigger.1} parent=1 // pred_check_branch
      %23 = sbr.rel (0) target = $region13
    $region12: #{int_state_trigger.1} parent=1 // pred_region
      _
    $region13: #{int_state_trigger.1} parent=1 // pred_fallthru
      _
    // Predicated region
    $region14: #{int_state_trigger.1} parent=1 // pred_check
      _
    $region15: #{int_state_trigger.1} parent=1 // pred_check_branch
      %25 = sbr.rel (0) target = $region17
    $region16: #{int_state_trigger.1} parent=1 // pred_region
      %27 = dma.done [#allocation3], 128
    $region17: #{int_state_trigger.1} parent=1 // pred_fallthru
      _
    %v28 = vld [vmem:[#allocation2] sm:$0xff]
    %v29 = vld [vmem:[%s1] sm:$0xf]
    %v30 = vld [vmem:[%s2] sm:$0xf]
    %v31 = vperm.slane %v29, 0
    %vm32 = vcmp.ne.s32.totalorder %v28, %v31
    %v33 = vperm.slane %v30, 0
    %v34 = vsel %vm32, %v33, 0
    %vm35 = vcmask 261120
    %v36 = vsel %vm35, %v34, 0
    %v37 = vand.u32 %v36, 65535
    %v38 = vshrl.u32 %v36, 16
    %v39 = vcvt.s32.f32 %v37
    %v40 = vcvt.s32.f32 %v38
    %41 = vadd.xlane.f32.xlu0 %v39
    %v42 = vpop.xlane.xlu0 %41
    %43 = vadd.xlane.f32.xlu0 %v40
    %v44 = vpop.xlane.xlu0 %43
    %v45 = vcvt.f32.s32 %v42
    %v46 = vcvt.f32.s32 %v44
    %v47 = vshll.u32 %v46, 16
    %v48 = vadd.s32 %v47, %v45
    %vm49 = vcmp.eq.s32.totalorder %v48, 0
    %v50 = vsel %vm49, 1, 0
    %vm51 = vcmask 7168
    %52 = vst.msk [vmem:[%s3] sm:$0xff] %vm51, %v50
    %v53 = vperm.slane %v29, 1
    %vm54 = vcmp.ne.s32.totalorder %v28, %v53
    %v55 = vperm.slane %v30, 1
    %v56 = vsel %vm54, %v55, 0
    %v57 = vsel %vm35, %v56, 0
    %v58 = vand.u32 %v57, 65535
    %v59 = vshrl.u32 %v57, 16
    %v60 = vcvt.s32.f32 %v58
    %v61 = vcvt.s32.f32 %v59
    %62 = vadd.xlane.f32.xlu0 %v60
    %v63 = vpop.xlane.xlu0 %62
    %64 = vadd.xlane.f32.xlu0 %v61
    %v65 = vpop.xlane.xlu0 %64
    %v66 = vcvt.f32.s32 %v63
    %v67 = vcvt.f32.s32 %v65
    %v68 = vshll.u32 %v67, 16
    %v69 = vadd.s32 %v68, %v66
    %vm70 = vcmp.eq.s32.totalorder %v69, 0
    %v71 = vsel %vm70, 1, 0
    %vm72 = vcmask 15368
    %73 = vst.msk [vmem:[%s3] sm:$0xff] %vm72, %v71
    %v74 = vperm.slane %v29, 2
    %vm75 = vcmp.ne.s32.totalorder %v28, %v74
    %v76 = vperm.slane %v30, 2
    %v77 = vsel %vm75, %v76, 0
    %v78 = vsel %vm35, %v77, 0
    %v79 = vand.u32 %v78, 65535
    %v80 = vshrl.u32 %v78, 16
    %v81 = vcvt.s32.f32 %v79
    %v82 = vcvt.s32.f32 %v80
    %83 = vadd.xlane.f32.xlu0 %v81
    %v84 = vpop.xlane.xlu0 %83
    %85 = vadd.xlane.f32.xlu0 %v82
    %v86 = vpop.xlane.xlu0 %85
    %v87 = vcvt.f32.s32 %v84
    %v88 = vcvt.f32.s32 %v86
    %v89 = vshll.u32 %v88, 16
    %v90 = vadd.s32 %v89, %v87
    %vm91 = vcmp.eq.s32.totalorder %v90, 0
    %v92 = vsel %vm91, 1, 0
    %vm93 = vcmask 23568
    %94 = vst.msk [vmem:[%s3] sm:$0xff] %vm93, %v92
    %v95 = vperm.slane %v29, 3
    %vm96 = vcmp.ne.s32.totalorder %v28, %v95
    %v97 = vperm.slane %v30, 3
    %v98 = vsel %vm96, %v97, 0
    %v99 = vsel %vm35, %v98, 0
    %v100 = vand.u32 %v99, 65535
    %v101 = vshrl.u32 %v99, 16
    %v102 = vcvt.s32.f32 %v100
    %v103 = vcvt.s32.f32 %v101
    %104 = vadd.xlane.f32.xlu0 %v102
    %v105 = vpop.xlane.xlu0 %104
    %106 = vadd.xlane.f32.xlu0 %v103
    %v107 = vpop.xlane.xlu0 %106
    %v108 = vcvt.f32.s32 %v105
    %v109 = vcvt.f32.s32 %v107
    %v110 = vshll.u32 %v109, 16
    %v111 = vadd.s32 %v110, %v108
    %vm112 = vcmp.eq.s32.totalorder %v111, 0
    %v113 = vsel %vm112, 1, 0
    %vm114 = vcmask 31768
    %115 = vst.msk [vmem:[%s3] sm:$0xff] %vm114, %v113
    // Predicated region
    $region18: #{int_state_trigger.1} parent=1 // pred_check
      _
    $region19: #{int_state_trigger.1} parent=1 // pred_check_branch
      %117 = sbr.rel (0) target = $region21
    $region20: #{int_state_trigger.1} parent=1 // pred_region
      _
    $region21: #{int_state_trigger.1} parent=1 // pred_fallthru
      _
    // Predicated region
    $region22: #{int_state_trigger.1} parent=1 // pred_check
      _
    $region23: #{int_state_trigger.1} parent=1 // pred_check_branch
      %119 = sbr.rel (0) target = $region25
    $region24: #{int_state_trigger.1} parent=1 // pred_region
      _
    $region25: #{int_state_trigger.1} parent=1 // pred_fallthru
      _
    %120 = vsyncpa [#allocation3], 1

</llo_original>
